<compile_context>
chip_gen: v5e
topology: v5e:2x2
jax: 0.10.0
libtpu: 0.0.40
codegen_flags: <defaults>
</compile_context>

<pallas_src>
import functools

import jax
import jax.numpy as jnp
from jax import lax
from jax.experimental import pallas as pl
from jax.experimental.pallas import tpu as pltpu


def _backend_kernel(x_ref, w1t_ref, b1_ref, w2_ref, b2_ref, o_ref, pooled_ref,
                    *, tb_sub, num_chunks, inv_hw):
    # x_ref     : (TB, CD, HW)      input dtype (f32 or bf16), cast in-kernel
    # w1t_ref   : (HIDDEN, CD)      bf16
    # b1_ref    : (HIDDEN, 1)       f32
    # w2_ref    : (HIDDEN, NC_PAD)  f32
    # b2_ref    : (1, NC_PAD)       f32
    # o_ref     : (TB, NC_PAD)      f32   (lane-dense store)
    # pooled_ref: (TB, HIDDEN)      f32   VMEM scratch
    hidden, cd = w1t_ref.shape

    # Hoisted once per grid step: chunk-sized (NOT TB-sized) weight broadcast
    # for the batched MXU matmul, plus the conv bias.
    w1t_b = jnp.broadcast_to(w1t_ref[...], (tb_sub, hidden, cd))
    b1 = b1_ref[...]                                   # (HIDDEN, 1)

    def conv_pool_chunk(start):
        # In-register bf16 cast of this chunk only (x stays f32 in HBM/VMEM).
        xb = x_ref[pl.ds(start, tb_sub), :, :].astype(jnp.bfloat16)
        # 1x1 conv == batched matmul contracting CD; HW sits on lanes.
        h = lax.dot_general(
            w1t_b, xb,
            dimension_numbers=(((2,), (1,)), ((0,), (0,))),
            preferred_element_type=jnp.float32)        # (tb_sub, HIDDEN, HW) f32
        h = jnp.maximum(h + b1, 0.0)
        # Global average pool over spatial (lane axis); 1/HW is a trace-time
        # constant of the FULL H*W (not the block's), per the review note.
        pooled_ref[pl.ds(start, tb_sub), :] = jnp.sum(h, axis=-1) * inv_hw

    if num_chunks == 1:
        conv_pool_chunk(0)
    else:
        def body(i, carry):
            conv_pool_chunk(pl.multiple_of(i * tb_sub, tb_sub))
            return carry
        lax.fori_loop(0, num_chunks, body, 0)

    # Classifier head; class axis zero-padded to a lane-dense 128 slab.
    logits = jnp.dot(pooled_ref[...], w2_ref[...],
                     preferred_element_type=jnp.float32)
    o_ref[...] = (logits + b2_ref[...]).astype(o_ref.dtype)


def flat_model_forward(x, w1, b1, w2, b2, *, block_batch=512):
    """x: (N, C, D, H, W).  Returns (N, NUM_CLASSES) float32 logits.

    block_batch: frames per grid step.  ~512 fits v5e's scoped VMEM at these
    channel counts; ~1024 is a good choice on v6e/v7x.
    """
    n, c, d, h, w = x.shape
    cd, hw = c * d, h * w
    hidden = w1.shape[1]
    num_classes = w2.shape[1]

    # FlatModel view + spatial flatten: adjacent-dim merges only -> free
    # reshape, no HBM transpose and NO dtype cast (cast happens in-kernel).
    x_k = x.reshape(n, cd, hw)

    # Tiny one-off parameter reshuffles (all << 1 KiB).
    w1t = jnp.transpose(w1).astype(jnp.bfloat16)              # (HIDDEN, CD)
    b1c = b1.reshape(hidden, 1).astype(jnp.float32)           # (HIDDEN, 1)
    nc_pad = ((num_classes + 127) // 128) * 128               # lane-dense out
    w2p = jnp.zeros((hidden, nc_pad), jnp.float32).at[:, :num_classes].set(
        w2.astype(jnp.float32))
    b2p = jnp.zeros((1, nc_pad), jnp.float32).at[:, :num_classes].set(
        b2.reshape(1, num_classes).astype(jnp.float32))

    # ---- Tile selection ---------------------------------------------------
    tb = max(1, min(block_batch, n))
    # Inner chunk so the live f32 conv intermediate (tb_sub*HIDDEN*HW*4 B)
    # stays ~<=2 MiB regardless of TB / spatial size.
    max_sub = max(8, (2 << 20) // max(1, hidden * hw * 4))
    if tb >= 8:
        tb_sub = min(128, max_sub, tb)
        tb_sub = max(8, (tb_sub // 8) * 8)
        tb = max(tb_sub, (tb // tb_sub) * tb_sub)   # tb multiple of tb_sub
    else:
        tb_sub = tb
    num_chunks = tb // tb_sub

    # ---- Explicit scoped-VMEM budget ---------------------------------------
    xb_itemsize = jnp.dtype(x_k.dtype).itemsize
    vmem_est = (
        2 * tb * cd * hw * xb_itemsize        # x block, double-buffered
        + 2 * tb * nc_pad * 4                 # out block, double-buffered
        + tb * hidden * 4                     # pooled scratch
        + tb_sub * hidden * hw * 4            # f32 conv chunk
        + tb_sub * cd * hw * 2                # bf16 x chunk
        + tb_sub * hidden * cd * 2            # chunk-broadcast weight
        + 2 * (hidden * cd * 2 + hidden * 4 + hidden * nc_pad * 4 + nc_pad * 4))
    # Floor 32 MiB (safe on all gens), cap 48 MiB (leaves headroom on v7x's
    # 64 MiB-per-TC VMEM).
    vmem_limit = int(min(max(1.5 * vmem_est + (4 << 20), 32 << 20), 48 << 20))

    kernel = functools.partial(
        _backend_kernel, tb_sub=tb_sub, num_chunks=num_chunks,
        inv_hw=1.0 / float(hw))

    out = pl.pallas_call(
        kernel,
        out_shape=jax.ShapeDtypeStruct((n, nc_pad), jnp.float32),
        grid=(pl.cdiv(n, tb),),               # ragged last block: no jnp.pad
        in_specs=[
            pl.BlockSpec((tb, cd, hw), lambda i: (i, 0, 0)),
            pl.BlockSpec((hidden, cd), lambda i: (0, 0)),
            pl.BlockSpec((hidden, 1), lambda i: (0, 0)),
            pl.BlockSpec((hidden, nc_pad), lambda i: (0, 0)),
            pl.BlockSpec((1, nc_pad), lambda i: (0, 0)),
        ],
        out_specs=pl.BlockSpec((tb, nc_pad), lambda i: (i, 0)),
        scratch_shapes=[pltpu.VMEM((tb, hidden), jnp.float32)],
        compiler_params=pltpu.CompilerParams(
            dimension_semantics=("parallel",),
            vmem_limit_bytes=vmem_limit),
    )(x_k, w1t, b1c, w2p, b2p)
    return out[:, :num_classes]


def reference_forward(x, w1, b1, w2, b2):
    n, c, d, h, w = x.shape
    x2 = x.reshape(n, c * d, h * w)                           # (N, CD, HW)
    hdn = jnp.einsum("ncp,ch->nph", x2, w1) + b1.reshape(1, 1, -1)
    hdn = jnp.maximum(hdn, 0.0)
    pooled = jnp.mean(hdn, axis=1)                            # (N, HIDDEN)
    return pooled @ w2 + b2.reshape(1, -1)


if __name__ == "__main__":
    # Small shapes consistent with the module: (batch, channel, depth, H, W).
    C, D, H, W = 4, 4, 8, 8
    CD = C * D
    HIDDEN = 32
    NUM_CLASSES = 10

    key = jax.random.PRNGKey(0)
    kx, k1, k2, k3, k4, kx2 = jax.random.split(key, 6)

    # Deterministic synthetic backend parameters.
    w1 = jax.random.normal(k1, (CD, HIDDEN), dtype=jnp.float32) * 0.1
    b1 = jax.random.normal(k2, (1, HIDDEN), dtype=jnp.float32) * 0.1
    w2 = jax.random.normal(k3, (HIDDEN, NUM_CLASSES), dtype=jnp.float32) * 0.1
    b2 = jax.random.normal(k4, (1, NUM_CLASSES), dtype=jnp.float32) * 0.1

    # --- Test 1: tiny batch (single chunk, single grid step) ---------------
    N1 = 2
    x1 = jax.random.normal(kx, (N1, C, D, H, W), dtype=jnp.float32)
    out1 = jax.block_until_ready(flat_model_forward(x1, w1, b1, w2, b2))
    ref1 = reference_forward(x1, w1, b1, w2, b2)
    assert out1.shape == (N1, NUM_CLASSES)
    # bf16 inputs to the first matmul (f32 accumulation) -> loosened tolerance.
    assert jnp.allclose(out1, ref1, atol=5e-2, rtol=5e-2), (
        float(jnp.max(jnp.abs(out1 - ref1))))

    # --- Test 2: exercises multi-chunk inner loop + ragged (partial) block --
    N2 = 300
    x2 = jax.random.normal(kx2, (N2, C, D, H, W), dtype=jnp.float32)
    out2 = jax.block_until_ready(
        flat_model_forward(x2, w1, b1, w2, b2, block_batch=256))
    ref2 = reference_forward(x2, w1, b1, w2, b2)
    assert out2.shape == (N2, NUM_CLASSES)
    assert jnp.allclose(out2, ref2, atol=5e-2, rtol=5e-2), (
        float(jnp.max(jnp.abs(out2 - ref2))))

    print("KERNEL_OK")
</pallas_src>

<mosaic_0001>
module attributes {stable_mosaic.version = 11 : i64} {
  func.func @_backend_kernel(%arg0: i32, %arg1: memref<2x16x64xf32, #tpu.memory_space<vmem>>, %arg2: memref<32x16xbf16, #tpu.memory_space<vmem>>, %arg3: memref<32x1xf32, #tpu.memory_space<vmem>>, %arg4: memref<32x128xf32, #tpu.memory_space<vmem>>, %arg5: memref<1x128xf32, #tpu.memory_space<vmem>>, %arg6: memref<2x128xf32, #tpu.memory_space<vmem>>, %arg7: memref<2x32xf32, #tpu.memory_space<vmem>>) attributes {dimension_semantics = [#tpu.dimension_semantics<parallel>], iteration_bounds = array<i64: 1>, scalar_prefetch = 0 : i64, scratch_operands = 1 : i64, tpu.core_type = #tpu.core_type<tc>, window_params = [{transform_indices = @transform_0, window_bounds = array<i64: 2, 16, 64>}, {pipeline_mode = #tpu.pipeline_mode<synchronous>, transform_indices = @transform_1, window_bounds = array<i64: 32, 16>}, {pipeline_mode = #tpu.pipeline_mode<synchronous>, transform_indices = @transform_2, window_bounds = array<i64: 32, 1>}, {pipeline_mode = #tpu.pipeline_mode<synchronous>, transform_indices = @transform_3, window_bounds = array<i64: 32, 128>}, {pipeline_mode = #tpu.pipeline_mode<synchronous>, transform_indices = @transform_4, window_bounds = array<i64: 1, 128>}, {transform_indices = @transform_5, window_bounds = array<i64: 2, 128>}]} {
    %c0 = arith.constant 0 : index
    %c0_0 = arith.constant 0 : index
    %0 = vector.load %arg2[%c0, %c0_0] : memref<32x16xbf16, #tpu.memory_space<vmem>>, vector<32x16xbf16>
    %1 = vector.shape_cast %0 : vector<32x16xbf16> to vector<1x32x16xbf16>
    %2 = vector.broadcast %1 : vector<1x32x16xbf16> to vector<2x32x16xbf16>
    %c0_1 = arith.constant 0 : index
    %c0_2 = arith.constant 0 : index
    %3 = vector.load %arg3[%c0_1, %c0_2] : memref<32x1xf32, #tpu.memory_space<vmem>>, vector<32x1xf32>
    %c0_3 = arith.constant 0 : index
    %c0_4 = arith.constant 0 : index
    %c0_5 = arith.constant 0 : index
    %4 = vector.load %arg1[%c0_3, %c0_4, %c0_5] : memref<2x16x64xf32, #tpu.memory_space<vmem>>, vector<2x16x64xf32>
    %5 = arith.truncf %4 : vector<2x16x64xf32> to vector<2x16x64xbf16>
    %cst = arith.constant dense<0.000000e+00> : vector<2x32x64xf32>
    %6 = tpu.matmul %2, %5, %cst {dimension_numbers = #tpu.dot_dimension_numbers<[2], [1], [1], [2], [0, 0, 0, 1, 1, 2], [0], [0]>} : vector<2x32x16xbf16>, vector<2x16x64xbf16>, vector<2x32x64xf32> -> vector<2x32x64xf32>
    %7 = vector.shape_cast %3 : vector<32x1xf32> to vector<1x32x1xf32>
    %8 = vector.broadcast %7 : vector<1x32x1xf32> to vector<2x32x64xf32>
    %9 = arith.addf %6, %8 : vector<2x32x64xf32>
    %cst_6 = arith.constant 0.000000e+00 : f32
    %10 = vector.broadcast %cst_6 : f32 to vector<2x32x64xf32>
    %11 = arith.maximumf %9, %10 : vector<2x32x64xf32>
    %cst_7 = arith.constant dense<0.000000e+00> : vector<2x32xf32>
    %12 = vector.multi_reduction <add>, %11, %cst_7 [2] : vector<2x32x64xf32> to vector<2x32xf32>
    %cst_8 = arith.constant 1.562500e-02 : f32
    %13 = vector.broadcast %cst_8 : f32 to vector<2x32xf32>
    %14 = arith.mulf %12, %13 : vector<2x32xf32>
    %c0_9 = arith.constant 0 : index
    %c0_10 = arith.constant 0 : index
    %15 = vector.load %arg7[%c0_9, %c0_10] : memref<2x32xf32, #tpu.memory_space<vmem>>, vector<2x32xf32>
    tpu.vector_store %arg7[%c0_9, %c0_10], %14 {strides = array<i32>} : memref<2x32xf32, #tpu.memory_space<vmem>>, vector<2x32xf32>,
    %c0_11 = arith.constant 0 : index
    %c0_12 = arith.constant 0 : index
    %16 = vector.load %arg7[%c0_11, %c0_12] : memref<2x32xf32, #tpu.memory_space<vmem>>, vector<2x32xf32>
    %c0_13 = arith.constant 0 : index
    %c0_14 = arith.constant 0 : index
    %17 = vector.load %arg4[%c0_13, %c0_14] : memref<32x128xf32, #tpu.memory_space<vmem>>, vector<32x128xf32>
    %cst_15 = arith.constant dense<0.000000e+00> : vector<2x128xf32>
    %18 = tpu.matmul %16, %17, %cst_15 {dimension_numbers = #tpu.dot_dimension_numbers<[1], [0], [0], [1], [0, 0, 1, 1], [], []>} : vector<2x32xf32>, vector<32x128xf32>, vector<2x128xf32> -> vector<2x128xf32>
    %c0_16 = arith.constant 0 : index
    %c0_17 = arith.constant 0 : index
    %19 = vector.load %arg5[%c0_16, %c0_17] : memref<1x128xf32, #tpu.memory_space<vmem>>, vector<1x128xf32>
    %20 = vector.broadcast %19 : vector<1x128xf32> to vector<2x128xf32>
    %21 = arith.addf %18, %20 : vector<2x128xf32>
    %c0_18 = arith.constant 0 : index
    %c0_19 = arith.constant 0 : index
    %22 = vector.load %arg6[%c0_18, %c0_19] : memref<2x128xf32, #tpu.memory_space<vmem>>, vector<2x128xf32>
    tpu.vector_store %arg6[%c0_18, %c0_19], %21 {strides = array<i32>} : memref<2x128xf32, #tpu.memory_space<vmem>>, vector<2x128xf32>,
    return
  }
  func.func @transform_0(%arg0: i32) -> (i32, i32, i32) {
    %c0_i32 = arith.constant 0 : i32
    %c0_i32_0 = arith.constant 0 : i32
    %c0_i32_1 = arith.constant 0 : i32
    return %arg0, %c0_i32, %c0_i32_0 : i32, i32, i32
  }
  func.func @transform_1(%arg0: i32) -> (i32, i32) {
    %c0_i32 = arith.constant 0 : i32
    %c0_i32_0 = arith.constant 0 : i32
    %c0_i32_1 = arith.constant 0 : i32
    return %c0_i32, %c0_i32_0 : i32, i32
  }
  func.func @transform_2(%arg0: i32) -> (i32, i32) {
    %c0_i32 = arith.constant 0 : i32
    %c0_i32_0 = arith.constant 0 : i32
    %c0_i32_1 = arith.constant 0 : i32
    return %c0_i32, %c0_i32_0 : i32, i32
  }
  func.func @transform_3(%arg0: i32) -> (i32, i32) {
    %c0_i32 = arith.constant 0 : i32
    %c0_i32_0 = arith.constant 0 : i32
    %c0_i32_1 = arith.constant 0 : i32
    return %c0_i32, %c0_i32_0 : i32, i32
  }
  func.func @transform_4(%arg0: i32) -> (i32, i32) {
    %c0_i32 = arith.constant 0 : i32
    %c0_i32_0 = arith.constant 0 : i32
    %c0_i32_1 = arith.constant 0 : i32
    return %c0_i32, %c0_i32_0 : i32, i32
  }
  func.func @transform_5(%arg0: i32) -> (i32, i32) {
    %c0_i32 = arith.constant 0 : i32
    %c0_i32_0 = arith.constant 0 : i32
    return %arg0, %c0_i32 : i32, i32
  }
}

</mosaic_0001>

<llo_original>
// kernel: tpu_custom_call.1
$region0: #{tpu_custom_call.1}
  #allocation0 [shape = 'u32[]', space=smem, size = 0x4, offset = 0x4, fixed_abs, tag = 'smem constant byte address 0x4 - core index']
  #allocation1 [shape = 'u32[72,128]{1,0:T(1,128)}', space=vmem, size = 0x9000, scoped, tag = 'internal scratch']
  #allocation2 [shape = 'f32[2,32]{1,0:T(2,128)}', space=vmem, size = 0x400, scoped, tag = 'scratch operand']
  %s0 = inlined_call_operand.vmem [shape: f32[2,16,64], index: 0, kind: input, shape index: {}]
  %s1 = inlined_call_operand.vmem [shape: bf16[32,16], index: 1, kind: input, shape index: {}]
  %s2 = inlined_call_operand.vmem [shape: f32[32,1], index: 2, kind: input, shape index: {}]
  %s3 = inlined_call_operand.hbm [shape: f32[32,128], index: 3, kind: input, shape index: {}]
  %s4 = inlined_call_operand.vmem [shape: f32[1,128], index: 4, kind: input, shape index: {}]
  %s5 = inlined_call_operand.hbm [shape: f32[2,128], index: 5, kind: output, shape index: {}]
  %s6 = sld [smem:[#allocation0]]
  $region34: #{tpu_custom_call.1} parent=0
    _
  %s8 = ssub.s32 1, %s6
  %s9 = scalar_select 0, %s8, %s6
  $region1: #{tpu_custom_call.1} parent=0
    #allocation3 [shape = 'u8[16384]{0}', space=vmem, size = 0x4000, scoped, tag = 'input window, operand 3, single buffered']
    #allocation4 [shape = 's32[1]{0}', space=sflag, size = 0x4, scoped, tag = 'scoped memory for tpu_custom_call.1']
    #allocation5 [shape = 's32[1]{0}', space=sflag, size = 0x4, scoped, tag = 'scoped memory for tpu_custom_call.1']
    #allocation6 [shape = 'u8[1024]{0}', space=vmem, size = 0x400, scoped, tag = 'output window, operand 0, single buffered']
    %10 = vsyncpa [#allocation4], 0
    %11 = vsyncpa [#allocation5], 0
    // Predicated region
    $region2: #{tpu_custom_call.1} parent=1 // pred_check
      _
    $region3: #{tpu_custom_call.1} parent=1 // pred_check_branch
      %13 = sbr.rel (0) target = $region5
    $region4: #{tpu_custom_call.1} parent=1 // pred_region
      _
    $region5: #{tpu_custom_call.1} parent=1 // pred_fallthru
      _
    // Predicated region
    $region6: #{tpu_custom_call.1} parent=1 // pred_check
      _
    $region7: #{tpu_custom_call.1} parent=1 // pred_check_branch
      %15 = sbr.rel (0) target = $region9
    $region8: #{tpu_custom_call.1} parent=1 // pred_region
      _
    $region9: #{tpu_custom_call.1} parent=1 // pred_fallthru
      _
    // Predicated region
    $region10: #{tpu_custom_call.1} parent=1 // pred_check
      _
    $region11: #{tpu_custom_call.1} parent=1 // pred_check_branch
      %17 = sbr.rel (0) target = $region13
    $region12: #{tpu_custom_call.1} parent=1 // pred_region
      _
    $region13: #{tpu_custom_call.1} parent=1 // pred_fallthru
      _
    // Predicated region
    $region14: #{tpu_custom_call.1} parent=1 // pred_check
      _
    $region15: #{tpu_custom_call.1} parent=1 // pred_check_branch
      %19 = sbr.rel (0) target = $region17
    $region16: #{tpu_custom_call.1} parent=1 // pred_region
      %21 = vsyncadd [#allocation4], 0
      %s22 = sshll.u32 %s3, 4
      %s23 = int_to_ptr.hbm [resolvable:$true] %s22
      %s24 = sshll.u32 [#allocation3], 4
      %s25 = int_to_ptr.vmem [resolvable:$true] %s24
      %30 = dma.hbm_to_vmem [thread:$0]  %s23, 512, %s25, [#allocation4], 128, 128, 8
    $region17: #{tpu_custom_call.1} parent=1 // pred_fallthru
      _
    // Predicated region
    $region18: #{tpu_custom_call.1} parent=1 // pred_check
      _
    $region19: #{tpu_custom_call.1} parent=1 // pred_check_branch
      %32 = sbr.rel (0) target = $region21
    $region20: #{tpu_custom_call.1} parent=1 // pred_region
      _
    $region21: #{tpu_custom_call.1} parent=1 // pred_fallthru
      _
    // Predicated region
    $region22: #{tpu_custom_call.1} parent=1 // pred_check
      _
    $region23: #{tpu_custom_call.1} parent=1 // pred_check_branch
      %34 = sbr.rel (0) target = $region25
    $region24: #{tpu_custom_call.1} parent=1 // pred_region
      %36 = dma.done [#allocation4], 512
    $region25: #{tpu_custom_call.1} parent=1 // pred_fallthru
      _
    %v38 = vld [vmem:[%s1] sm:$0xf]
    %v39 = vld [vmem:[%s1 + $0x4] sm:$0xf]
    %v40 = vld [vmem:[%s1 + $0x8] sm:$0xf]
    %v41 = vld [vmem:[%s1 + $0xc] sm:$0xf]
    %v42 = vld [vmem:[%s2] sm:$0xff]
    %v43 = vld [vmem:[%s2 + $0x8] sm:$0xff]
    %v44 = vld [vmem:[%s2 + $0x10] sm:$0xff]
    %v45 = vld [vmem:[%s2 + $0x18] sm:$0xff]
    %v46 = vld [vmem:[%s0] sm:$0xff]
    %v47 = vld [vmem:[%s0 + $0x8] sm:$0xff]
    %v48 = vld [vmem:[%s0 + $0x10] sm:$0xff]
    %v49 = vld [vmem:[%s0 + $0x18] sm:$0xff]
    %v50 = vpack.c.bf16 %v46, %v46
    %v51 = vpack.c.bf16 %v47, %v47
    %v52 = vpack.c.bf16 %v48, %v48
    %v53 = vpack.c.bf16 %v49, %v49
    %55 = vset.pattern.permute.xlu0 0
    %56 = vperm.xlu0 %55, %v42
    %v57 = vpop.permute.xlu0 %56
    %60 = vset.pattern.permute.xlu0 0
    %61 = vperm.xlu0 %60, %v43
    %v62 = vpop.permute.xlu0 %61
    %65 = vset.pattern.permute.xlu0 0
    %66 = vperm.xlu0 %65, %v44
    %v67 = vpop.permute.xlu0 %66
    %70 = vset.pattern.permute.xlu0 0
    %71 = vperm.xlu0 %70, %v45
    %v72 = vpop.permute.xlu0 %71
    %v78 = vunpack.c.l.b16 %v38
    %v79 = vunpack.c.l.b16 %v39
    %v80 = vunpack.c.l.b16 %v40
    %v81 = vunpack.c.l.b16 %v41
    %v82 = vpack.c.b16 %v79, %v78
    %v83 = vpack.c.b16 %v81, %v80
    %v86 = vunpack.c.l.b16 %v50
    %v87 = vunpack.c.l.b16 %v51
    %v88 = vpack.c.b16 %v87, %v86
    %vm90 = vcmask 130048
    %v92 = vsel %vm90, %v82, 0
    %v95 = vsel %vm90, %v83, 0
    %97 = vmatpush.bf16.msra.mxu0 0
    %98 = vmatpush.bf16.msra.mxu0 0
    %99 = vmatpush.bf16.msra.mxu0 0
    %100 = vmatpush.bf16.msra.mxu0 0
    %101 = vmatpush.bf16.msra.mxu0 0
    %102 = vmatpush.bf16.msra.mxu0 0
    %103 = vmatpush.bf16.msra.mxu0 0
    %104 = vmatpush.bf16.msra.mxu0 %v88
    %105 = vmatmul.bf16.gmra.mxu0 %v92
    %v106 = vpop.f32.mrf.mxu0
    %v107 = vadd.f32 %v57, %v106
    %v108 = vpop.f32.mrf.mxu0
    %v109 = vadd.f32 %v62, %v108
    %110 = vmatmul.bf16.gmra.mxu0 %v95
    %v111 = vpop.f32.mrf.mxu0
    %v112 = vadd.f32 %v67, %v111
    %v113 = vpop.f32.mrf.mxu0
    %v114 = vadd.f32 %v72, %v113
    %115 = vdwg.mxu0
    %v118 = vunpack.c.l.b16 %v52
    %v119 = vunpack.c.l.b16 %v53
    %v120 = vpack.c.b16 %v119, %v118
    %122 = vmatpush.bf16.msra.mxu0 0
    %123 = vmatpush.bf16.msra.mxu0 0
    %124 = vmatpush.bf16.msra.mxu0 0
    %125 = vmatpush.bf16.msra.mxu0 0
    %126 = vmatpush.bf16.msra.mxu0 0
    %127 = vmatpush.bf16.msra.mxu0 0
    %128 = vmatpush.bf16.msra.mxu0 0
    %129 = vmatpush.bf16.msra.mxu0 %v120
    %130 = vmatmul.bf16.gmra.mxu0 %v92
    %v131 = vpop.f32.mrf.mxu0
    %v132 = vadd.f32 %v57, %v131
    %v133 = vpop.f32.mrf.mxu0
    %v134 = vadd.f32 %v62, %v133
    %135 = vmatmul.bf16.gmra.mxu0 %v95
    %v136 = vpop.f32.mrf.mxu0
    %v137 = vadd.f32 %v67, %v136
    %v138 = vpop.f32.mrf.mxu0
    %v139 = vadd.f32 %v72, %v138
    %140 = vdwg.mxu0
    %v141 = vmax.f32 %v107, 0.0
    %v142 = vmax.f32 %v109, 0.0
    %v143 = vmax.f32 %v112, 0.0
    %v144 = vmax.f32 %v114, 0.0
    %v145 = vmax.f32 %v132, 0.0
    %v146 = vmax.f32 %v134, 0.0
    %v147 = vmax.f32 %v137, 0.0
    %v148 = vmax.f32 %v139, 0.0
    %vm149 = vcmask 523264
    %v150 = vsel %vm149, %v141, 0.0
    %151 = vadd.xlane.f32.xlu0 %v150
    %v152 = vpop.xlane.xlu0 %151
    %v153 = vsel %vm149, %v142, 0.0
    %154 = vadd.xlane.f32.xlu0 %v153
    %v155 = vpop.xlane.xlu0 %154
    %v156 = vsel %vm149, %v143, 0.0
    %157 = vadd.xlane.f32.xlu0 %v156
    %v158 = vpop.xlane.xlu0 %157
    %v159 = vsel %vm149, %v144, 0.0
    %160 = vadd.xlane.f32.xlu0 %v159
    %v161 = vpop.xlane.xlu0 %160
    %v162 = vsel %vm149, %v145, 0.0
    %163 = vadd.xlane.f32.xlu0 %v162
    %v164 = vpop.xlane.xlu0 %163
    %v165 = vsel %vm149, %v146, 0.0
    %166 = vadd.xlane.f32.xlu0 %v165
    %v167 = vpop.xlane.xlu0 %166
    %v168 = vsel %vm149, %v147, 0.0
    %169 = vadd.xlane.f32.xlu0 %v168
    %v170 = vpop.xlane.xlu0 %169
    %v171 = vsel %vm149, %v148, 0.0
    %172 = vadd.xlane.f32.xlu0 %v171
    %v173 = vpop.xlane.xlu0 %172
    %v174 = vmul.f32 %v152, 0.015625
    %v175 = vmul.f32 %v155, 0.015625
    %v176 = vmul.f32 %v158, 0.015625
    %v177 = vmul.f32 %v161, 0.015625
    %v178 = vmul.f32 %v164, 0.015625
    %v179 = vmul.f32 %v167, 0.015625
    %v180 = vmul.f32 %v170, 0.015625
    %v181 = vmul.f32 %v173, 0.015625
    %v190 = vlaneseq
    %v191 = vand.u32 %v190, 127
    %v192 = vperm.slane %v174, %v191
    %v193 = vadd.s32 %v191, 4294967288
    %v194 = vperm.slane %v175, %v193
    %vm195 = vcmask 130112
    %v196 = vsel %vm195, %v194, %v192
    %v197 = vadd.s32 %v191, 4294967280
    %v198 = vperm.slane %v176, %v197
    %vm199 = vcmask 195712
    %v200 = vsel %vm199, %v198, %v196
    %v201 = vadd.s32 %v191, 4294967272
    %v202 = vperm.slane %v177, %v201
    %vm203 = vcmask 261312
    %v204 = vsel %vm203, %v202, %v200
    %v205 = vperm.slane %v178, %v191
    %v206 = vperm.slane %v179, %v193
    %v207 = vsel %vm195, %v206, %v205
    %v208 = vperm.slane %v180, %v197
    %v209 = vsel %vm199, %v208, %v207
    %v210 = vperm.slane %v181, %v201
    %v211 = vsel %vm203, %v210, %v209
    %vm212 = vcmask 1041409
    %v213 = vsel %vm212, %v211, %v204
    %vm215 = vcmask 254976
    %216 = vst.msk [vmem:[#allocation2] sm:$0x3] %vm215, %v213
    %v217 = vld [vmem:[#allocation2] sm:$0x3]
    %v218 = vld [vmem:[#allocation3] sm:$0xff]
    %v219 = vld [vmem:[#allocation3 + $0x8] sm:$0xff]
    %v220 = vld [vmem:[#allocation3 + $0x10] sm:$0xff]
    %v221 = vld [vmem:[#allocation3 + $0x18] sm:$0xff]
    %v222 = vld [vmem:[%s4] sm:$0x1]
    %v224 = vperm.slane %v222, 0
    %vm226 = vcmask 261120
    %v228 = vsel %vm226, %v217, 0
    %230 = vmatpush.msra.mxu0 0.0
    %231 = vmatpush.msra.mxu0 0.0
    %232 = vmatpush.msra.mxu0 0.0
    %233 = vmatpush.msra.mxu0 0.0
    %234 = vmatpush.msra.mxu0 0.0
    %235 = vmatpush.msra.mxu0 0.0
    %236 = vmatpush.msra.mxu0 0.0
    %237 = vmatpush.msra.mxu0 0.0
    %238 = vmatpush.msra.mxu0 0.0
    %239 = vmatpush.msra.mxu0 0.0
    %240 = vmatpush.msra.mxu0 0.0
    %241 = vmatpush.msra.mxu0 0.0
    %242 = vmatpush.msra.mxu0 %v221
    %243 = vmatpush.msra.mxu0 %v220
    %244 = vmatpush.msra.mxu0 %v219
    %245 = vmatpush.msra.mxu0 %v218
    %246 = vmatmul.f32.gmra.mxu0 %v228
    %v247 = vpop.f32.mrf.mxu0
    %v248 = vadd.f32 %v224, %v247
    %249 = vdwg.mxu0
    %250 = vst [vmem:[#allocation6] sm:$0x3] %v248
    // Predicated region
    $region26: #{tpu_custom_call.1} parent=1 // pred_check
      _
    $region27: #{tpu_custom_call.1} parent=1 // pred_check_branch
      %252 = sbr.rel (0) target = $region29
    $region28: #{tpu_custom_call.1} parent=1 // pred_region
      %254 = vsyncadd [#allocation5], 0
      %s256 = sshll.u32 [#allocation6], 4
      %s257 = int_to_ptr.vmem [resolvable:$true] %s256
      %s258 = sshll.u32 %s5, 4
      %s259 = int_to_ptr.hbm [resolvable:$true] %s258
      %261 = dma.vmem_to_hbm [thread:$0]  %s257, 32, %s259, [#allocation5]
    $region29: #{tpu_custom_call.1} parent=1 // pred_fallthru
      _
    // Predicated region
    $region30: #{tpu_custom_call.1} parent=1 // pred_check
      _
    $region31: #{tpu_custom_call.1} parent=1 // pred_check_branch
      %263 = sbr.rel (0) target = $region33
    $region32: #{tpu_custom_call.1} parent=1 // pred_region
      %265 = dma.done [#allocation5], 32
    $region33: #{tpu_custom_call.1} parent=1 // pred_fallthru
      _
    %266 = vsyncpa [#allocation4], 1
    %267 = vsyncpa [#allocation5], 1

</llo_original>
